<compile_context>
chip_gen: v5e
topology: v5e:2x2
jax: 0.10.0
libtpu: 0.0.40
codegen_flags: <defaults>
</compile_context>

<pallas_src>
import functools

import jax
import jax.numpy as jnp
from jax.experimental import pallas as pl
from jax.experimental.pallas import tpu as pltpu


def _round_up(x, m):
    return ((x + m - 1) // m) * m


def _elmo_kernel(nw_ref, acts_ref, w_ref, b_ref, out_ref):
    # nw_ref: SMEM (3,) pre-normalized (softmaxed) scalar-mix weights, f32.
    a0 = nw_ref[0]
    a1 = nw_ref[1]
    a2 = nw_ref[2]

    w = w_ref[...]  # (D, nhid) bf16, resident across the grid.

    # Layer mix folded into the MXU: three bf16 dots with f32 accumulation.
    # The a_k scaling is applied to the small (tile, nhid) f32 results, so the
    # only wide VPU work is the final bias + ReLU on (tile, nhid).
    p0 = jnp.dot(acts_ref[0], w, preferred_element_type=jnp.float32)
    p1 = jnp.dot(acts_ref[1], w, preferred_element_type=jnp.float32)
    p2 = jnp.dot(acts_ref[2], w, preferred_element_type=jnp.float32)

    proj = a0 * p0 + a1 * p1 + a2 * p2 + b_ref[...]  # b_ref: (1, nhid) broadcast
    out_ref[...] = jnp.maximum(proj, 0.0).astype(out_ref.dtype)


@functools.partial(jax.jit, static_argnames=("tn", "out_dtype"))
def elmo_head(acts, weight_param, w, b, *, tn=2048, out_dtype=jnp.bfloat16):
    """acts: (3, N, 1024) bf16; weight_param: (3,); w: (1024, nhid) bf16; b: (nhid,).

    Returns (N, nhid) in out_dtype. N need not divide the tile (ragged last
    tile is handled by Pallas write masking; no HBM-side padding).
    """
    L, N, D = acts.shape
    nhid = w.shape[1]

    # Row tile: multiple of 16 (bf16 packs two rows per sublane), clamped to
    # the problem size, and capped so the grid has >= 2 steps when N allows
    # (keeps both v7x TensorCores busy via the "parallel" grid axis).
    tile = min(_round_up(tn, 16), _round_up(N, 16))
    if N > 16:
        tile = min(tile, _round_up(-(-N // 2), 16))
    tile = max(tile, 16)
    grid = pl.cdiv(N, tile)

    # Grid-invariant scalar-mix softmax hoisted out of the kernel body.
    normed_weights = jax.nn.softmax(weight_param.astype(jnp.float32))
    b2d = b.reshape(1, nhid).astype(jnp.float32)

    acts_bytes = jnp.dtype(acts.dtype).itemsize
    w_bytes = jnp.dtype(w.dtype).itemsize
    out_bytes = jnp.dtype(out_dtype).itemsize

    # VMEM budget derived from the actual footprint:
    #   double-buffered acts tiles + double-buffered out tiles + resident W, b.
    footprint = (
        2 * L * tile * D * acts_bytes
        + 2 * tile * nhid * out_bytes
        + 2 * D * nhid * w_bytes
        + 2 * nhid * 4
    )
    vmem_limit = int(min(footprint + 8 * 1024 * 1024, 96 * 1024 * 1024))

    cost = pl.CostEstimate(
        flops=2 * L * N * D * nhid,
        transcendentals=0,
        bytes_accessed=(
            L * N * D * acts_bytes + D * nhid * w_bytes + nhid * 4
            + N * nhid * out_bytes
        ),
    )

    # TODO(synk): if nhid grows past ~1-2K, add a second "parallel" grid axis
    #             over nhid blocks instead of keeping the full W block resident.
    grid_spec = pltpu.PrefetchScalarGridSpec(
        num_scalar_prefetch=1,  # normed_weights -> SMEM, passed first to kernel
        grid=(grid,),
        in_specs=[
            pl.BlockSpec((L, tile, D), lambda i, nw: (0, i, 0)),
            pl.BlockSpec((D, nhid), lambda i, nw: (0, 0)),
            pl.BlockSpec((1, nhid), lambda i, nw: (0, 0)),
        ],
        out_specs=pl.BlockSpec((tile, nhid), lambda i, nw: (i, 0)),
    )

    return pl.pallas_call(
        _elmo_kernel,
        out_shape=jax.ShapeDtypeStruct((N, nhid), out_dtype),
        grid_spec=grid_spec,
        compiler_params=pltpu.CompilerParams(
            dimension_semantics=("parallel",),
            vmem_limit_bytes=vmem_limit,
        ),
        cost_estimate=cost,
    )(normed_weights, acts, w, b2d)


def elmo_forward(elmo_activations, weight_param, w, b, batch, seq_len, *,
                 tn=2048, out_dtype=jnp.bfloat16):
    """elmo_activations: (3, B, T, 1024) with T = seq_len + 2.

    Returns (B, T, nhid), matching the PyTorch ELMo.forward output.
    """
    L, B, T, D = elmo_activations.shape
    assert B == batch and T == seq_len + 2
    acts_flat = elmo_activations.reshape(L, B * T, D)
    out_flat = elmo_head(acts_flat, weight_param, w, b, tn=tn, out_dtype=out_dtype)
    return out_flat.reshape(B, T, -1)


def _reference(elmo_activations, weight_param, w, b):
    nw = jax.nn.softmax(weight_param.astype(jnp.float32))
    acts_f32 = elmo_activations.astype(jnp.float32)
    mixed = jnp.einsum("l...d,l->...d", acts_f32, nw)
    proj = mixed @ w.astype(jnp.float32) + b.astype(jnp.float32)
    return jnp.maximum(proj, 0.0)


if __name__ == "__main__":
    key = jax.random.PRNGKey(0)
    k_act, k_w, k_b, k_wp = jax.random.split(key, 4)

    # Small shapes: batch=2, seq_len=9 -> T = seq_len + 2 = 11, N = B*T = 22
    # (deliberately not a multiple of the tile to exercise the ragged path).
    B, S, D, NHID = 2, 9, 1024, 128
    T = S + 2

    # Synthetic (deterministic) ELMo BiLM activations: 3 layers x (B, T, 1024),
    # stored in bf16 (activation reads dominate HBM traffic).
    elmo_activations = jax.random.normal(k_act, (3, B, T, D), dtype=jnp.float32)
    elmo_activations = elmo_activations.astype(jnp.bfloat16)

    # Module parameters (deterministic init). W fed to the MXU in bf16.
    weight_param = 0.1 * jax.random.normal(k_wp, (3,), dtype=jnp.float32)
    lin_w = jax.random.normal(k_w, (D, NHID), dtype=jnp.float32) * (1.0 / jnp.sqrt(D))
    lin_w = lin_w.astype(jnp.bfloat16)
    lin_b = 0.01 * jax.random.normal(k_b, (NHID,), dtype=jnp.float32)

    out = elmo_forward(elmo_activations, weight_param, lin_w, lin_b, B, S)
    out = jax.block_until_ready(out)

    ref = _reference(elmo_activations, weight_param, lin_w, lin_b)
    assert out.shape == (B, T, NHID), out.shape
    out_f32 = out.astype(jnp.float32)
    max_err = float(jnp.max(jnp.abs(out_f32 - ref)))
    assert jnp.allclose(out_f32, ref, atol=5e-2, rtol=5e-2), max_err

    print("KERNEL_OK")
</pallas_src>

<mosaic_0001>
module attributes {stable_mosaic.version = 11 : i64} {
  func.func @_elmo_kernel(%arg0: i32, %arg1: memref<3xf32, #tpu.memory_space<smem>>, %arg2: memref<3x16x1024xbf16, #tpu.memory_space<vmem>>, %arg3: memref<1024x128xbf16, #tpu.memory_space<vmem>>, %arg4: memref<1x128xf32, #tpu.memory_space<vmem>>, %arg5: memref<16x128xbf16, #tpu.memory_space<vmem>>) attributes {dimension_semantics = [#tpu.dimension_semantics<parallel>], iteration_bounds = array<i64: 2>, scalar_prefetch = 1 : i64, scratch_operands = 0 : i64, tpu.core_type = #tpu.core_type<tc>, window_params = [{transform_indices = @transform_0, window_bounds = array<i64: 3, 16, 1024>}, {pipeline_mode = #tpu.pipeline_mode<synchronous>, transform_indices = @transform_1, window_bounds = array<i64: 1024, 128>}, {pipeline_mode = #tpu.pipeline_mode<synchronous>, transform_indices = @transform_2, window_bounds = array<i64: 1, 128>}, {transform_indices = @transform_3, window_bounds = array<i64: 16, 128>}]} {
    %c0 = arith.constant 0 : index
    %0 = memref.load %arg1[%c0] : memref<3xf32, #tpu.memory_space<smem>>
    %c1 = arith.constant 1 : index
    %1 = memref.load %arg1[%c1] : memref<3xf32, #tpu.memory_space<smem>>
    %c2 = arith.constant 2 : index
    %2 = memref.load %arg1[%c2] : memref<3xf32, #tpu.memory_space<smem>>
    %c0_0 = arith.constant 0 : index
    %c0_1 = arith.constant 0 : index
    %3 = vector.load %arg3[%c0_0, %c0_1] : memref<1024x128xbf16, #tpu.memory_space<vmem>>, vector<1024x128xbf16>
    %c0_2 = arith.constant 0 : index
    %c0_3 = arith.constant 0 : index
    %c0_4 = arith.constant 0 : index
    %4 = vector.load %arg2[%c0_2, %c0_3, %c0_4] : memref<3x16x1024xbf16, #tpu.memory_space<vmem>>, vector<1x16x1024xbf16>
    %5 = vector.shape_cast %4 : vector<1x16x1024xbf16> to vector<16x1024xbf16>
    %cst = arith.constant dense<0.000000e+00> : vector<16x128xf32>
    %6 = tpu.matmul %5, %3, %cst {dimension_numbers = #tpu.dot_dimension_numbers<[1], [0], [0], [1], [0, 0, 1, 1], [], []>} : vector<16x1024xbf16>, vector<1024x128xbf16>, vector<16x128xf32> -> vector<16x128xf32>
    %c1_5 = arith.constant 1 : index
    %c0_6 = arith.constant 0 : index
    %c0_7 = arith.constant 0 : index
    %7 = vector.load %arg2[%c1_5, %c0_6, %c0_7] : memref<3x16x1024xbf16, #tpu.memory_space<vmem>>, vector<1x16x1024xbf16>
    %8 = vector.shape_cast %7 : vector<1x16x1024xbf16> to vector<16x1024xbf16>
    %cst_8 = arith.constant dense<0.000000e+00> : vector<16x128xf32>
    %9 = tpu.matmul %8, %3, %cst_8 {dimension_numbers = #tpu.dot_dimension_numbers<[1], [0], [0], [1], [0, 0, 1, 1], [], []>} : vector<16x1024xbf16>, vector<1024x128xbf16>, vector<16x128xf32> -> vector<16x128xf32>
    %c2_9 = arith.constant 2 : index
    %c0_10 = arith.constant 0 : index
    %c0_11 = arith.constant 0 : index
    %10 = vector.load %arg2[%c2_9, %c0_10, %c0_11] : memref<3x16x1024xbf16, #tpu.memory_space<vmem>>, vector<1x16x1024xbf16>
    %11 = vector.shape_cast %10 : vector<1x16x1024xbf16> to vector<16x1024xbf16>
    %cst_12 = arith.constant dense<0.000000e+00> : vector<16x128xf32>
    %12 = tpu.matmul %11, %3, %cst_12 {dimension_numbers = #tpu.dot_dimension_numbers<[1], [0], [0], [1], [0, 0, 1, 1], [], []>} : vector<16x1024xbf16>, vector<1024x128xbf16>, vector<16x128xf32> -> vector<16x128xf32>
    %13 = vector.broadcast %0 : f32 to vector<16x128xf32>
    %14 = arith.mulf %13, %6 : vector<16x128xf32>
    %15 = vector.broadcast %1 : f32 to vector<16x128xf32>
    %16 = arith.mulf %15, %9 : vector<16x128xf32>
    %17 = arith.addf %14, %16 : vector<16x128xf32>
    %18 = vector.broadcast %2 : f32 to vector<16x128xf32>
    %19 = arith.mulf %18, %12 : vector<16x128xf32>
    %20 = arith.addf %17, %19 : vector<16x128xf32>
    %c0_13 = arith.constant 0 : index
    %c0_14 = arith.constant 0 : index
    %21 = vector.load %arg4[%c0_13, %c0_14] : memref<1x128xf32, #tpu.memory_space<vmem>>, vector<1x128xf32>
    %22 = vector.broadcast %21 : vector<1x128xf32> to vector<16x128xf32>
    %23 = arith.addf %20, %22 : vector<16x128xf32>
    %cst_15 = arith.constant 0.000000e+00 : f32
    %24 = vector.broadcast %cst_15 : f32 to vector<16x128xf32>
    %25 = arith.maximumf %23, %24 : vector<16x128xf32>
    %26 = arith.truncf %25 : vector<16x128xf32> to vector<16x128xbf16>
    %c0_16 = arith.constant 0 : index
    %c0_17 = arith.constant 0 : index
    %27 = vector.load %arg5[%c0_16, %c0_17] : memref<16x128xbf16, #tpu.memory_space<vmem>>, vector<16x128xbf16>
    tpu.vector_store %arg5[%c0_16, %c0_17], %26 {strides = array<i32>} : memref<16x128xbf16, #tpu.memory_space<vmem>>, vector<16x128xbf16>,
    return
  }
  func.func @transform_0(%arg0: i32, %arg1: memref<3xf32, #tpu.memory_space<smem>>) -> (i32, i32, i32) {
    %c0_i32 = arith.constant 0 : i32
    %c0_i32_0 = arith.constant 0 : i32
    %c0_i32_1 = arith.constant 0 : i32
    return %c0_i32, %arg0, %c0_i32_0 : i32, i32, i32
  }
  func.func @transform_1(%arg0: i32, %arg1: memref<3xf32, #tpu.memory_space<smem>>) -> (i32, i32) {
    %c0_i32 = arith.constant 0 : i32
    %c0_i32_0 = arith.constant 0 : i32
    %c0_i32_1 = arith.constant 0 : i32
    return %c0_i32, %c0_i32_0 : i32, i32
  }
  func.func @transform_2(%arg0: i32, %arg1: memref<3xf32, #tpu.memory_space<smem>>) -> (i32, i32) {
    %c0_i32 = arith.constant 0 : i32
    %c0_i32_0 = arith.constant 0 : i32
    %c0_i32_1 = arith.constant 0 : i32
    return %c0_i32, %c0_i32_0 : i32, i32
  }
  func.func @transform_3(%arg0: i32, %arg1: memref<3xf32, #tpu.memory_space<smem>>) -> (i32, i32) {
    %c0_i32 = arith.constant 0 : i32
    %c0_i32_0 = arith.constant 0 : i32
    return %arg0, %c0_i32 : i32, i32
  }
}

</mosaic_0001>

<llo_original>
// kernel: elmo_head.1
$region0: #{elmo_head.1}
  #allocation0 [shape = 'u32[]', space=smem, size = 0x4, offset = 0x4, fixed_abs, tag = 'smem constant byte address 0x4 - core index']
  #allocation1 [shape = 'u32[72,128]{1,0:T(1,128)}', space=vmem, size = 0x9000, scoped, tag = 'internal scratch']
  #allocation2 [shape = 's32[1]{0}', space=sflag, size = 0x4, scoped, tag = 'scoped memory for elmo_head.1']
  #allocation3 [shape = 'u8[512]{0}', space=smem, size = 0x200, scoped, tag = 'prefetched SMEM operand 0']
  #allocation10 [shape = 's32[]', space=sflag, size = 0x4, offset = 0, fixed_abs, tag = 'sflag constant byte address 0x0 - dummy sync flag']
  %s0 = inlined_call_operand.vmem [shape: f32[3], index: 0, kind: input, shape index: {}]
  %s1 = inlined_call_operand.hbm [shape: bf16[3,22,1024], index: 1, kind: input, shape index: {}]
  %s2 = inlined_call_operand.hbm [shape: bf16[1024,128], index: 2, kind: input, shape index: {}]
  %s3 = inlined_call_operand.vmem [shape: f32[1,128], index: 3, kind: input, shape index: {}]
  %s4 = inlined_call_operand.hbm [shape: bf16[22,128], index: 4, kind: output, shape index: {}]
  %s5 = sld [smem:[#allocation0]]
  $region53: #{elmo_head.1} parent=0
    _
  %s7 = ssub.s32 1, %s5
  %s8 = scalar_select 0, %s7, %s5
  %s10 = sshll.u32 %s0, 4
  %s11 = int_to_ptr.vmem [resolvable:$true] %s10
  %13 = dma.vmem_to_smem %s11, 16, [#allocation3], [#allocation2]
  %15 = dma.done [#allocation2], 16
  %16 = sfence
  $region1: #{elmo_head.1} parent=0
    #allocation4 [shape = 'u8[196608]{0}', space=vmem, size = 0x30000, scoped, tag = 'input window, operand 1']
    #allocation5 [shape = 's32[2]{0}', space=sflag, size = 0x8, scoped, tag = 'scoped memory for elmo_head.1']
    #allocation6 [shape = 's32[2]{0}', space=sflag, size = 0x8, scoped, tag = 'scoped memory for elmo_head.1']
    #allocation7 [shape = 'u8[262144]{0}', space=vmem, size = 0x40000, scoped, tag = 'input window, operand 2, single buffered']
    #allocation8 [shape = 's32[1]{0}', space=sflag, size = 0x4, scoped, tag = 'scoped memory for elmo_head.1']
    #allocation9 [shape = 'u8[8192]{0}', space=vmem, size = 0x2000, scoped, tag = 'output window, operand 0']
    %17 = vsyncpa [#allocation5], 0
    %s18 = scalar_lea.sflag [#allocation5], 1
    %19 = vsyncpa %s18, 0
    %20 = vsyncpa [#allocation8], 0
    %21 = vsyncpa [#allocation6], 0
    %s22 = scalar_lea.sflag [#allocation6], 1
    %23 = vsyncpa %s22, 0
    loop: start=0, step=1, limit=4
    $region2: #{elmo_head.1} parent=1 // loop_pre_header
      _
    $region3: #{elmo_head.1} parent=1 // loop_header
      %s25 = sphi 0, %s29
      %p26 = scmp.ge.s32.totalorder %s25, 4
      %s35 = sphi 0, %s37
      %s38 = sphi 0, %s35
      %s39 = sphi 0, %s38
      %s55 = sphi 0, %s39
      %s59 = sphi 0, %s59
      %s61 = sphi 0, %s59
      %s62 = sphi 0, %s61
      %s76 = sphi 0, %s62
      %s80 = sphi 0, %s80
      %s82 = sphi 0, %s80
      %s83 = sphi 0, %s82
      %s97 = sphi 0, %s83
      %s103 = sphi 0, %s105
      %s106 = sphi 0, %s103
      %s107 = sphi 0, %s106
      %s123 = sphi 0, %s107
    $region4: #{elmo_head.1} parent=1 // loop_header_branch
      %28 = sbr.rel (%p26) target = $region8
    $region5: #{elmo_head.1} parent=1 // loop_body
      %s30 = ssub.s32 %s25, 1
      %s31 = ssub.s32 %s25, 2
      %s32 = sadd.s32 %s25, 1
      %s33 = ssub.s32 %s25, %s32
      %p34 = scmp.eq.s32.totalorder %s33, 0
      %s36 = sadd.s32 %s35, 1
      %s37 = scalar_select %p34, %s35, %s36
      %p40 = pneg %p34
      %p41 = scmp.eq.s32.totalorder %s25, 1
      %p42 = por %p40, %p41
      %p43 = scmp.ne.s32.totalorder %s35, %s38
      %p44 = scmp.eq.s32.totalorder %s25, 0
      %p45 = por %p43, %p44
      %p46 = scmp.ne.s32.totalorder %s35, %s38
      %p47 = scmp.eq.s32.totalorder %s30, 1
      %p48 = por %p46, %p47
      %p49 = scmp.ne.s32.totalorder %s38, %s39
      %p50 = scmp.eq.s32.totalorder %s30, 0
      %p51 = por %p49, %p50
      %p52 = scmp.ne.s32.totalorder %s38, %s39
      %p53 = scmp.eq.s32.totalorder %s31, 1
      %p54 = por %p52, %p53
      %p56 = scmp.ne.s32.totalorder %s39, %s55
      %p57 = scmp.eq.s32.totalorder %s31, 0
      %p58 = por %p56, %p57
      %s60 = sadd.s32 %s59, 1
      %p63 = scmp.eq.s32.totalorder %s25, 1
      %p64 = scmp.ne.s32.totalorder %s59, %s61
      %p65 = scmp.eq.s32.totalorder %s25, 0
      %p66 = por %p64, %p65
      %p67 = scmp.ne.s32.totalorder %s59, %s61
      %p68 = scmp.eq.s32.totalorder %s30, 1
      %p69 = por %p67, %p68
      %p70 = scmp.ne.s32.totalorder %s61, %s62
      %p71 = scmp.eq.s32.totalorder %s30, 0
      %p72 = por %p70, %p71
      %p73 = scmp.ne.s32.totalorder %s61, %s62
      %p74 = scmp.eq.s32.totalorder %s31, 1
      %p75 = por %p73, %p74
      %p77 = scmp.ne.s32.totalorder %s62, %s76
      %p78 = scmp.eq.s32.totalorder %s31, 0
      %p79 = por %p77, %p78
      %s81 = sadd.s32 %s80, 1
      %p84 = scmp.eq.s32.totalorder %s25, 1
      %p85 = scmp.ne.s32.totalorder %s80, %s82
      %p86 = scmp.eq.s32.totalorder %s25, 0
      %p87 = por %p85, %p86
      %p88 = scmp.ne.s32.totalorder %s80, %s82
      %p89 = scmp.eq.s32.totalorder %s30, 1
      %p90 = por %p88, %p89
      %p91 = scmp.ne.s32.totalorder %s82, %s83
      %p92 = scmp.eq.s32.totalorder %s30, 0
      %p93 = por %p91, %p92
      %p94 = scmp.ne.s32.totalorder %s82, %s83
      %p95 = scmp.eq.s32.totalorder %s31, 1
      %p96 = por %p94, %p95
      %p98 = scmp.ne.s32.totalorder %s83, %s97
      %p99 = scmp.eq.s32.totalorder %s31, 0
      %p100 = por %p98, %p99
      %s101 = ssub.s32 %s25, %s32
      %p102 = scmp.eq.s32.totalorder %s101, 0
      %s104 = sadd.s32 %s103, 1
      %s105 = scalar_select %p102, %s103, %s104
      %p108 = pneg %p102
      %p109 = scmp.eq.s32.totalorder %s25, 1
      %p110 = por %p108, %p109
      %p111 = scmp.ne.s32.totalorder %s103, %s106
      %p112 = scmp.eq.s32.totalorder %s25, 0
      %p113 = por %p111, %p112
      %p114 = scmp.ne.s32.totalorder %s103, %s106
      %p115 = scmp.eq.s32.totalorder %s30, 1
      %p116 = por %p114, %p115
      %p117 = scmp.ne.s32.totalorder %s106, %s107
      %p118 = scmp.eq.s32.totalorder %s30, 0
      %p119 = por %p117, %p118
      %p120 = scmp.ne.s32.totalorder %s106, %s107
      %p121 = scmp.eq.s32.totalorder %s31, 1
      %p122 = por %p120, %p121
      %p124 = scmp.ne.s32.totalorder %s107, %s123
      %p125 = scmp.eq.s32.totalorder %s31, 0
      %p126 = por %p124, %p125
      %p127 = scmp.le.s32.totalorder 1, %s25
      %p128 = scmp.lt.s32.totalorder %s25, 3
      %p129 = pnand %p127, %p128
      %p130 = pneg %p129
      // Predicated region
      $region9: #{elmo_head.1} parent=5 // pred_check
        _
      $region10: #{elmo_head.1} parent=5 // pred_check_branch
        %132 = sbr.rel (%p129) target = $region12
      $region11: #{elmo_head.1} parent=5 // pred_region
        %s133 = ssub.s32 %s25, 1
        // Predicated region
        $region13: #{elmo_head.1} parent=11 // pred_check
          %p134 = pneg %p72
        $region14: #{elmo_head.1} parent=11 // pred_check_branch
          %136 = sbr.rel (%p134) target = $region16
        $region15: #{elmo_head.1} parent=11 // pred_region
          %138 = vsyncadd [#allocation8], 0
          %s139 = sshll.u32 %s2, 4
          %s140 = int_to_ptr.hbm [resolvable:$true] %s139
          %s141 = sshll.u32 [#allocation7], 4
          %s142 = int_to_ptr.vmem [resolvable:$true] %s141
          %147 = dma.hbm_to_vmem [thread:$0]  %s140, 8192, %s142, [#allocation8], 64, 64, 4
        $region16: #{elmo_head.1} parent=11 // pred_fallthru
          _
        // Predicated region
        $region17: #{elmo_head.1} parent=11 // pred_check
          %p148 = pneg %p93
        $region18: #{elmo_head.1} parent=11 // pred_check_branch
          %150 = sbr.rel (%p148) target = $region20
        $region19: #{elmo_head.1} parent=11 // pred_region
          _
        $region20: #{elmo_head.1} parent=11 // pred_fallthru
          _
      $region12: #{elmo_head.1} parent=5 // pred_fallthru
        _
      %p151 = scmp.lt.s32.totalorder %s25, 2
      // Predicated region
      $region21: #{elmo_head.1} parent=5 // pred_check
        %p152 = pneg %p151
      $region22: #{elmo_head.1} parent=5 // pred_check_branch
        %154 = sbr.rel (%p152) target = $region24
      $region23: #{elmo_head.1} parent=5 // pred_region
        // Predicated region
        $region25: #{elmo_head.1} parent=23 // pred_check
          %p155 = pneg %p45
        $region26: #{elmo_head.1} parent=23 // pred_check_branch
          %157 = sbr.rel (%p155) target = $region28
        $region27: #{elmo_head.1} parent=23 // pred_region
          #allocation11 [shape = 'u32[6]{0}', space=smem, size = 0x18, scoped, tag = 'DMA stride descriptor']
          %s158 = sand.u32 %s35, 1
          %s159 = scalar_lea.sflag [#allocation5], %s158
          %s160 = sand.u32 %s35, 1
          %s161 = smul.addr %s160, 192
          %s162 = scalar_lea.vmem [#allocation4], %s161
          %s163 = smul.u32 2, %s25
          %s164 = ssub.s32 3, %s163
          %p165 = scmp.lt.s32.totalorder %s164, 2
          %s166 = scalar_select %p165, %s164, 2
          %s167 = smul.u32 12, %s166
          %s168 = smul.u32 %s167, 8
          %s169 = ssub.s32 192, %s168
          %s170 = sshll.u32 %s169, 4
          %171 = vsyncadd %s159, %s170
          %p172 = scmp.ne.s32.totalorder 0, %s168
          %s173 = smul.addr %s163, 8
          %s174 = smul.addr %s173, 4
          %s175 = scalar_lea.hbm %s1, %s174
          %s176 = smul.u32 32, %s166
          %s177 = smul.u32 %s176, 3
          %s179 = sshll.u32 1, 14
          %s180 = sxor.u32 4294967295, %s179
          %s182 = sld [smem:[#allocation0]]
          %s183 = sadd.s32 2, %s182
          %s185 = sshll.u32 7, 26
          %s186 = sxor.u32 4294967295, %s185
          %s187 = sand.u32 0, %s186
          %s188 = sshll.u32 %s183, 26
          %s189 = sor.u32 %s187, %s188
          %s190 = sshll.u32 %s175, 4
          %s191 = int_to_ptr.hbm [resolvable:$true] %s190
          %s192 = sshll.u32 %s162, 4
          %s193 = int_to_ptr.vmem [resolvable:$true] %s192
          %s194 = sshll.u32 %s177, 4
          %199 = sst [smem:[#allocation11]] 1536
          %s200 = scalar_lea.smem [#allocation11], 1
          %201 = sst [smem:[%s200]] 1024
          %s202 = scalar_lea.smem [#allocation11], 2
          %203 = sst [smem:[%s202]] %s166
          %s204 = scalar_lea.smem [#allocation11], 3
          %205 = sst [smem:[%s204]] 512
          %s206 = scalar_lea.smem [#allocation11], 4
          %207 = sst [smem:[%s206]] 512
          %s208 = scalar_lea.smem [#allocation11], 5
          %209 = sst [smem:[%s208]] 32
          %211 = dma.general (%p172), %s191, %s194, %s193, %s159, [#allocation10], [#allocation11], %s189, 0
        $region28: #{elmo_head.1} parent=23 // pred_fallthru
          _
      $region24: #{elmo_head.1} parent=5 // pred_fallthru
        _
      %p212 = scmp.le.s32.totalorder 1, %s25
      %p213 = scmp.lt.s32.totalorder %s25, 3
      %p214 = pnand %p212, %p213
      %p215 = pneg %p214
      // Predicated region
      $region29: #{elmo_head.1} parent=5 // pred_check
        _
      $region30: #{elmo_head.1} parent=5 // pred_check_branch
        %217 = sbr.rel (%p214) target = $region32
      $region31: #{elmo_head.1} parent=5 // pred_region
        %s218 = ssub.s32 %s25, 1
        %s219 = sand.u32 %s38, 1
        %s220 = scalar_lea.sflag [#allocation5], %s219
        %s221 = sand.u32 %s38, 1
        %s222 = smul.addr %s221, 192
        %s223 = scalar_lea.vmem [#allocation4], %s222
        // Predicated region
        $region33: #{elmo_head.1} parent=31 // pred_check
          %p224 = pneg %p51
        $region34: #{elmo_head.1} parent=31 // pred_check_branch
          %226 = sbr.rel (%p224) target = $region36
        $region35: #{elmo_head.1} parent=31 // pred_region
          %228 = dma.done %s220, 3072
        $region36: #{elmo_head.1} parent=31 // pred_fallthru
          _
        // Predicated region
        $region37: #{elmo_head.1} parent=31 // pred_check
          %p229 = pneg %p72
        $region38: #{elmo_head.1} parent=31 // pred_check_branch
          %231 = sbr.rel (%p229) target = $region40
        $region39: #{elmo_head.1} parent=31 // pred_region
          %233 = dma.done [#allocation8], 8192
        $region40: #{elmo_head.1} parent=31 // pred_fallthru
          _
        %s234 = sand.u32 %s38, 1
        %s235 = scalar_lea.sflag [#allocation5], %s234
        %s236 = sand.u32 %s38, 1
        %s237 = smul.addr %s236, 192
        %s238 = scalar_lea.vmem [#allocation4], %s237
        %p239 = pneg %p51
        %p240 = pneg %p48
        %p241 = pneg %p72
        %p242 = pneg %p69
        %p243 = pneg %p93
        %p244 = pneg %p90
        %p245 = pneg %p119
        %p246 = pneg %p116
        %s247 = sand.u32 %s106, 1
        %s248 = scalar_lea.sflag [#allocation6], %s247
        %s249 = sand.u32 %s106, 1
        %s250 = smul.addr %s249, 8
        %s251 = scalar_lea.vmem [#allocation9], %s250
        %s252 = smul.u32 2, %s30
        %s253 = ssub.s32 3, %s252
        %p254 = scmp.lt.s32.totalorder %s253, 2
        %s255 = scalar_select %p254, %s253, 2
        %s256 = smul.u32 12, %s255
        %s257 = smul.u32 %s256, 8
        %s258 = smul.u32 2, %s30
        %s259 = ssub.s32 3, %s258
        %p260 = scmp.lt.s32.totalorder %s259, 2
        %s261 = scalar_select %p260, %s259, 2
        %s262 = smul.u32 4, %s261
        %s263 = sld [smem:[#allocation3]]
        %s264 = sld [smem:[#allocation3 + $0x1]]
        %s265 = sld [smem:[#allocation3 + $0x2]]
        %v266 = vld [vmem:[#allocation7] sm:$0xf]
        %v267 = vld [vmem:[#allocation7 + $0x4] sm:$0xf]
        %v268 = vld [vmem:[#allocation7 + $0x8] sm:$0xf]
        %v269 = vld [vmem:[#allocation7 + $0xc] sm:$0xf]
        %v270 = vld [vmem:[#allocation7 + $0x10] sm:$0xf]
        %v271 = vld [vmem:[#allocation7 + $0x14] sm:$0xf]
        %v272 = vld [vmem:[#allocation7 + $0x18] sm:$0xf]
        %v273 = vld [vmem:[#allocation7 + $0x1c] sm:$0xf]
        %v274 = vld [vmem:[#allocation7 + $0x20] sm:$0xf]
        %v275 = vld [vmem:[#allocation7 + $0x24] sm:$0xf]
        %v276 = vld [vmem:[#allocation7 + $0x28] sm:$0xf]
        %v277 = vld [vmem:[#allocation7 + $0x2c] sm:$0xf]
        %v278 = vld [vmem:[#allocation7 + $0x30] sm:$0xf]
        %v279 = vld [vmem:[#allocation7 + $0x34] sm:$0xf]
        %v280 = vld [vmem:[#allocation7 + $0x38] sm:$0xf]
        %v281 = vld [vmem:[#allocation7 + $0x3c] sm:$0xf]
        %v282 = vld [vmem:[#allocation7 + $0x40] sm:$0xf]
        %v283 = vld [vmem:[#allocation7 + $0x44] sm:$0xf]
        %v284 = vld [vmem:[#allocation7 + $0x48] sm:$0xf]
        %v285 = vld [vmem:[#allocation7 + $0x4c] sm:$0xf]
        %v286 = vld [vmem:[#allocation7 + $0x50] sm:$0xf]
        %v287 = vld [vmem:[#allocation7 + $0x54] sm:$0xf]
        %v288 = vld [vmem:[#allocation7 + $0x58] sm:$0xf]
        %v289 = vld [vmem:[#allocation7 + $0x5c] sm:$0xf]
        %v290 = vld [vmem:[#allocation7 + $0x60] sm:$0xf]
        %v291 = vld [vmem:[#allocation7 + $0x64] sm:$0xf]
        %v292 = vld [vmem:[#allocation7 + $0x68] sm:$0xf]
        %v293 = vld [vmem:[#allocation7 + $0x6c] sm:$0xf]
        %v294 = vld [vmem:[#allocation7 + $0x70] sm:$0xf]
        %v295 = vld [vmem:[#allocation7 + $0x74] sm:$0xf]
        %v296 = vld [vmem:[#allocation7 + $0x78] sm:$0xf]
        %v297 = vld [vmem:[#allocation7 + $0x7c] sm:$0xf]
        %v298 = vld [vmem:[#allocation7 + $0x80] sm:$0xf]
        %v299 = vld [vmem:[#allocation7 + $0x84] sm:$0xf]
        %v300 = vld [vmem:[#allocation7 + $0x88] sm:$0xf]
        %v301 = vld [vmem:[#allocation7 + $0x8c] sm:$0xf]
        %v302 = vld [vmem:[#allocation7 + $0x90] sm:$0xf]
        %v303 = vld [vmem:[#allocation7 + $0x94] sm:$0xf]
        %v304 = vld [vmem:[#allocation7 + $0x98] sm:$0xf]
        %v305 = vld [vmem:[#allocation7 + $0x9c] sm:$0xf]
        %v306 = vld [vmem:[#allocation7 + $0xa0] sm:$0xf]
        %v307 = vld [vmem:[#allocation7 + $0xa4] sm:$0xf]
        %v308 = vld [vmem:[#allocation7 + $0xa8] sm:$0xf]
        %v309 = vld [vmem:[#allocation7 + $0xac] sm:$0xf]
        %v310 = vld [vmem:[#allocation7 + $0xb0] sm:$0xf]
        %v311 = vld [vmem:[#allocation7 + $0xb4] sm:$0xf]
        %v312 = vld [vmem:[#allocation7 + $0xb8] sm:$0xf]
        %v313 = vld [vmem:[#allocation7 + $0xbc] sm:$0xf]
        %v314 = vld [vmem:[#allocation7 + $0xc0] sm:$0xf]
        %v315 = vld [vmem:[#allocation7 + $0xc4] sm:$0xf]
        %v316 = vld [vmem:[#allocation7 + $0xc8] sm:$0xf]
        %v317 = vld [vmem:[#allocation7 + $0xcc] sm:$0xf]
        %v318 = vld [vmem:[#allocation7 + $0xd0] sm:$0xf]
        %v319 = vld [vmem:[#allocation7 + $0xd4] sm:$0xf]
        %v320 = vld [vmem:[#allocation7 + $0xd8] sm:$0xf]
        %v321 = vld [vmem:[#allocation7 + $0xdc] sm:$0xf]
        %v322 = vld [vmem:[#allocation7 + $0xe0] sm:$0xf]
        %v323 = vld [vmem:[#allocation7 + $0xe4] sm:$0xf]
        %v324 = vld [vmem:[#allocation7 + $0xe8] sm:$0xf]
        %v325 = vld [vmem:[#allocation7 + $0xec] sm:$0xf]
        %v326 = vld [vmem:[#allocation7 + $0xf0] sm:$0xf]
        %v327 = vld [vmem:[#allocation7 + $0xf4] sm:$0xf]
        %v328 = vld [vmem:[#allocation7 + $0xf8] sm:$0xf]
        %v329 = vld [vmem:[#allocation7 + $0xfc] sm:$0xf]
        %v330 = vld [vmem:[#allocation7 + $0x100] sm:$0xf]
        %v331 = vld [vmem:[#allocation7 + $0x104] sm:$0xf]
        %v332 = vld [vmem:[#allocation7 + $0x108] sm:$0xf]
        %v333 = vld [vmem:[#allocation7 + $0x10c] sm:$0xf]
        %v334 = vld [vmem:[#allocation7 + $0x110] sm:$0xf]
        %v335 = vld [vmem:[#allocation7 + $0x114] sm:$0xf]
        %v336 = vld [vmem:[#allocation7 + $0x118] sm:$0xf]
        %v337 = vld [vmem:[#allocation7 + $0x11c] sm:$0xf]
        %v338 = vld [vmem:[#allocation7 + $0x120] sm:$0xf]
        %v339 = vld [vmem:[#allocation7 + $0x124] sm:$0xf]
        %v340 = vld [vmem:[#allocation7 + $0x128] sm:$0xf]
        %v341 = vld [vmem:[#allocation7 + $0x12c] sm:$0xf]
        %v342 = vld [vmem:[#allocation7 + $0x130] sm:$0xf]
        %v343 = vld [vmem:[#allocation7 + $0x134] sm:$0xf]
        %v344 = vld [vmem:[#allocation7 + $0x138] sm:$0xf]
        %v345 = vld [vmem:[#allocation7 + $0x13c] sm:$0xf]
        %v346 = vld [vmem:[#allocation7 + $0x140] sm:$0xf]
        %v347 = vld [vmem:[#allocation7 + $0x144] sm:$0xf]
        %v348 = vld [vmem:[#allocation7 + $0x148] sm:$0xf]
        %v349 = vld [vmem:[#allocation7 + $0x14c] sm:$0xf]
        %v350 = vld [vmem:[#allocation7 + $0x150] sm:$0xf]
        %v351 = vld [vmem:[#allocation7 + $0x154] sm:$0xf]
        %v352 = vld [vmem:[#allocation7 + $0x158] sm:$0xf]
        %v353 = vld [vmem:[#allocation7 + $0x15c] sm:$0xf]
        %v354 = vld [vmem:[#allocation7 + $0x160] sm:$0xf]
        %v355 = vld [vmem:[#allocation7 + $0x164] sm:$0xf]
        %v356 = vld [vmem:[#allocation7 + $0x168] sm:$0xf]
        %v357 = vld [vmem:[#allocation7 + $0x16c] sm:$0xf]
        %v358 = vld [vmem:[#allocation7 + $0x170] sm:$0xf]
        %v359 = vld [vmem:[#allocation7 + $0x174] sm:$0xf]
        %v360 = vld [vmem:[#allocation7 + $0x178] sm:$0xf]
        %v361 = vld [vmem:[#allocation7 + $0x17c] sm:$0xf]
        %v362 = vld [vmem:[#allocation7 + $0x180] sm:$0xf]
        %v363 = vld [vmem:[#allocation7 + $0x184] sm:$0xf]
        %v364 = vld [vmem:[#allocation7 + $0x188] sm:$0xf]
        %v365 = vld [vmem:[#allocation7 + $0x18c] sm:$0xf]
        %v366 = vld [vmem:[#allocation7 + $0x190] sm:$0xf]
        %v367 = vld [vmem:[#allocation7 + $0x194] sm:$0xf]
        %v368 = vld [vmem:[#allocation7 + $0x198] sm:$0xf]
        %v369 = vld [vmem:[#allocation7 + $0x19c] sm:$0xf]
        %v370 = vld [vmem:[#allocation7 + $0x1a0] sm:$0xf]
        %v371 = vld [vmem:[#allocation7 + $0x1a4] sm:$0xf]
        %v372 = vld [vmem:[#allocation7 + $0x1a8] sm:$0xf]
        %v373 = vld [vmem:[#allocation7 + $0x1ac] sm:$0xf]
        %v374 = vld [vmem:[#allocation7 + $0x1b0] sm:$0xf]
        %v375 = vld [vmem:[#allocation7 + $0x1b4] sm:$0xf]
        %v376 = vld [vmem:[#allocation7 + $0x1b8] sm:$0xf]
        %v377 = vld [vmem:[#allocation7 + $0x1bc] sm:$0xf]
        %v378 = vld [vmem:[#allocation7 + $0x1c0] sm:$0xf]
        %v379 = vld [vmem:[#allocation7 + $0x1c4] sm:$0xf]
        %v380 = vld [vmem:[#allocation7 + $0x1c8] sm:$0xf]
        %v381 = vld [vmem:[#allocation7 + $0x1cc] sm:$0xf]
        %v382 = vld [vmem:[#allocation7 + $0x1d0] sm:$0xf]
        %v383 = vld [vmem:[#allocation7 + $0x1d4] sm:$0xf]
        %v384 = vld [vmem:[#allocation7 + $0x1d8] sm:$0xf]
        %v385 = vld [vmem:[#allocation7 + $0x1dc] sm:$0xf]
        %v386 = vld [vmem:[#allocation7 + $0x1e0] sm:$0xf]
        %v387 = vld [vmem:[#allocation7 + $0x1e4] sm:$0xf]
        %v388 = vld [vmem:[#allocation7 + $0x1e8] sm:$0xf]
        %v389 = vld [vmem:[#allocation7 + $0x1ec] sm:$0xf]
        %v390 = vld [vmem:[#allocation7 + $0x1f0] sm:$0xf]
        %v391 = vld [vmem:[#allocation7 + $0x1f4] sm:$0xf]
        %v392 = vld [vmem:[#allocation7 + $0x1f8] sm:$0xf]
        %v393 = vld [vmem:[#allocation7 + $0x1fc] sm:$0xf]
        %v394 = vld [vmem:[%s223] sm:$0xff]
        %v395 = vld [vmem:[%s223 + $0x8] sm:$0xff]
        %v396 = vld [vmem:[%s223 + $0x10] sm:$0xff]
        %v397 = vld [vmem:[%s223 + $0x18] sm:$0xff]
        %v398 = vld [vmem:[%s223 + $0x20] sm:$0xff]
        %v399 = vld [vmem:[%s223 + $0x28] sm:$0xff]
        %v400 = vld [vmem:[%s223 + $0x30] sm:$0xff]
        %v401 = vld [vmem:[%s223 + $0x38] sm:$0xff]
        %v410 = vunpack.c.l.b16 %v394
        %v411 = vunpack.c.h.b16 %v394
        %v412 = vunpack.c.l.b16 %v395
        %v413 = vunpack.c.h.b16 %v395
        %v414 = vunpack.c.l.b16 %v396
        %v415 = vunpack.c.h.b16 %v396
        %v416 = vunpack.c.l.b16 %v397
        %v417 = vunpack.c.h.b16 %v397
        %v418 = vunpack.c.l.b16 %v398
        %v419 = vunpack.c.h.b16 %v398
        %v420 = vunpack.c.l.b16 %v399
        %v421 = vunpack.c.h.b16 %v399
        %v422 = vunpack.c.l.b16 %v400
        %v423 = vunpack.c.h.b16 %v400
        %v424 = vunpack.c.l.b16 %v401
        %v425 = vunpack.c.h.b16 %v401
        %v426 = vpack.c.b16 %v418, %v410
        %v427 = vpack.c.b16 %v419, %v411
        %v428 = vpack.c.b16 %v420, %v412
        %v429 = vpack.c.b16 %v421, %v413
        %v430 = vpack.c.b16 %v422, %v414
        %v431 = vpack.c.b16 %v423, %v415
        %v432 = vpack.c.b16 %v424, %v416
        %v433 = vpack.c.b16 %v425, %v417
        %v570 = vunpack.c.l.b16 %v266
        %v571 = vunpack.c.l.b16 %v267
        %v572 = vunpack.c.l.b16 %v268
        %v573 = vunpack.c.l.b16 %v269
        %v574 = vunpack.c.l.b16 %v270
        %v575 = vunpack.c.l.b16 %v271
        %v576 = vunpack.c.l.b16 %v272
        %v577 = vunpack.c.l.b16 %v273
        %v578 = vunpack.c.l.b16 %v274
        %v579 = vunpack.c.l.b16 %v275
        %v580 = vunpack.c.l.b16 %v276
        %v581 = vunpack.c.l.b16 %v277
        %v582 = vunpack.c.l.b16 %v278
        %v583 = vunpack.c.l.b16 %v279
        %v584 = vunpack.c.l.b16 %v280
        %v585 = vunpack.c.l.b16 %v281
        %v586 = vunpack.c.l.b16 %v282
        %v587 = vunpack.c.l.b16 %v283
        %v588 = vunpack.c.l.b16 %v284
        %v589 = vunpack.c.l.b16 %v285
        %v590 = vunpack.c.l.b16 %v286
        %v591 = vunpack.c.l.b16 %v287
        %v592 = vunpack.c.l.b16 %v288
        %v593 = vunpack.c.l.b16 %v289
        %v594 = vunpack.c.l.b16 %v290
        %v595 = vunpack.c.l.b16 %v291
        %v596 = vunpack.c.l.b16 %v292
        %v597 = vunpack.c.l.b16 %v293
        %v598 = vunpack.c.l.b16 %v294
        %v599 = vunpack.c.l.b16 %v295
        %v600 = vunpack.c.l.b16 %v296
        %v601 = vunpack.c.l.b16 %v297
        %v602 = vunpack.c.l.b16 %v298
        %v603 = vunpack.c.l.b16 %v299
        %v604 = vunpack.c.l.b16 %v300
        %v605 = vunpack.c.l.b16 %v301
        %v606 = vunpack.c.l.b16 %v302
        %v607 = vunpack.c.l.b16 %v303
        %v608 = vunpack.c.l.b16 %v304
        %v609 = vunpack.c.l.b16 %v305
        %v610 = vunpack.c.l.b16 %v306
        %v611 = vunpack.c.l.b16 %v307
        %v612 = vunpack.c.l.b16 %v308
        %v613 = vunpack.c.l.b16 %v309
        %v614 = vunpack.c.l.b16 %v310
        %v615 = vunpack.c.l.b16 %v311
        %v616 = vunpack.c.l.b16 %v312
        %v617 = vunpack.c.l.b16 %v313
        %v618 = vunpack.c.l.b16 %v314
        %v619 = vunpack.c.l.b16 %v315
        %v620 = vunpack.c.l.b16 %v316
        %v621 = vunpack.c.l.b16 %v317
        %v622 = vunpack.c.l.b16 %v318
        %v623 = vunpack.c.l.b16 %v319
        %v624 = vunpack.c.l.b16 %v320
        %v625 = vunpack.c.l.b16 %v321
        %v626 = vunpack.c.l.b16 %v322
        %v627 = vunpack.c.l.b16 %v323
        %v628 = vunpack.c.l.b16 %v324
        %v629 = vunpack.c.l.b16 %v325
        %v630 = vunpack.c.l.b16 %v326
        %v631 = vunpack.c.l.b16 %v327
        %v632 = vunpack.c.l.b16 %v328
        %v633 = vunpack.c.l.b16 %v329
        %v634 = vunpack.c.l.b16 %v330
        %v635 = vunpack.c.l.b16 %v331
        %v636 = vunpack.c.l.b16 %v332
        %v637 = vunpack.c.l.b16 %v333
        %v638 = vunpack.c.l.b16 %v334
        %v639 = vunpack.c.l.b16 %v335
        %v640 = vunpack.c.l.b16 %v336
        %v641 = vunpack.c.l.b16 %v337
        %v642 = vunpack.c.l.b16 %v338
        %v643 = vunpack.c.l.b16 %v339
        %v644 = vunpack.c.l.b16 %v340
        %v645 = vunpack.c.l.b16 %v341
        %v646 = vunpack.c.l.b16 %v342
        %v647 = vunpack.c.l.b16 %v343
        %v648 = vunpack.c.l.b16 %v344
        %v649 = vunpack.c.l.b16 %v345
        %v650 = vunpack.c.l.b16 %v346
        %v651 = vunpack.c.l.b16 %v347
        %v652 = vunpack.c.l.b16 %v348
        %v653 = vunpack.c.l.b16 %v349
        %v654 = vunpack.c.l.b16 %v350
        %v655 = vunpack.c.l.b16 %v351
        %v656 = vunpack.c.l.b16 %v352
        %v657 = vunpack.c.l.b16 %v353
        %v658 = vunpack.c.l.b16 %v354
        %v659 = vunpack.c.l.b16 %v355
        %v660 = vunpack.c.l.b16 %v356
        %v661 = vunpack.c.l.b16 %v357
        %v662 = vunpack.c.l.b16 %v358
        %v663 = vunpack.c.l.b16 %v359
        %v664 = vunpack.c.l.b16 %v360
        %v665 = vunpack.c.l.b16 %v361
        %v666 = vunpack.c.l.b16 %v362
        %v667 = vunpack.c.l.b16 %v363
        %v668 = vunpack.c.l.b16 %v364
        %v669 = vunpack.c.l.b16 %v365
        %v670 = vunpack.c.l.b16 %v366
        %v671 = vunpack.c.l.b16 %v367
        %v672 = vunpack.c.l.b16 %v368
        %v673 = vunpack.c.l.b16 %v369
        %v674 = vunpack.c.l.b16 %v370
        %v675 = vunpack.c.l.b16 %v371
        %v676 = vunpack.c.l.b16 %v372
        %v677 = vunpack.c.l.b16 %v373
        %v678 = vunpack.c.l.b16 %v374
        %v679 = vunpack.c.l.b16 %v375
        %v680 = vunpack.c.l.b16 %v376
        %v681 = vunpack.c.l.b16 %v377
        %v682 = vunpack.c.l.b16 %v378
        %v683 = vunpack.c.l.b16 %v379
        %v684 = vunpack.c.l.b16 %v380
        %v685 = vunpack.c.l.b16 %v381
        %v686 = vunpack.c.l.b16 %v382
        %v687 = vunpack.c.l.b16 %v383
        %v688 = vunpack.c.l.b16 %v384
        %v689 = vunpack.c.l.b16 %v385
        %v690 = vunpack.c.l.b16 %v386
        %v691 = vunpack.c.l.b16 %v387
        %v692 = vunpack.c.l.b16 %v388
        %v693 = vunpack.c.l.b16 %v389
        %v694 = vunpack.c.l.b16 %v390
        %v695 = vunpack.c.l.b16 %v391
        %v696 = vunpack.c.l.b16 %v392
        %v697 = vunpack.c.l.b16 %v393
        %v698 = vpack.c.b16 %v571, %v570
        %v699 = vpack.c.b16 %v573, %v572
        %v700 = vpack.c.b16 %v575, %v574
        %v701 = vpack.c.b16 %v577, %v576
        %v702 = vpack.c.b16 %v579, %v578
        %v703 = vpack.c.b16 %v581, %v580
        %v704 = vpack.c.b16 %v583, %v582
        %v705 = vpack.c.b16 %v585, %v584
        %v706 = vpack.c.b16 %v587, %v586
        %v707 = vpack.c.b16 %v589, %v588
        %v708 = vpack.c.b16 %v591, %v590
        %v709 = vpack.c.b16 %v593, %v592
        %v710 = vpack.c.b16 %v595, %v594
        %v711 = vpack.c.b16 %v597, %v596
        %v712 = vpack.c.b16 %v599, %v598
        %v713 = vpack.c.b16 %v601, %v600
        %v714 = vpack.c.b16 %v603, %v602
        %v715 = vpack.c.b16 %v605, %v604
        %v716 = vpack.c.b16 %v607, %v606
        %v717 = vpack.c.b16 %v609, %v608
        %v718 = vpack.c.b16 %v611, %v610
        %v719 = vpack.c.b16 %v613, %v612
        %v720 = vpack.c.b16 %v615, %v614
        %v721 = vpack.c.b16 %v617, %v616
        %v722 = vpack.c.b16 %v619, %v618
        %v723 = vpack.c.b16 %v621, %v620
        %v724 = vpack.c.b16 %v623, %v622
        %v725 = vpack.c.b16 %v625, %v624
        %v726 = vpack.c.b16 %v627, %v626
        %v727 = vpack.c.b16 %v629, %v628
        %v728 = vpack.c.b16 %v631, %v630
        %v729 = vpack.c.b16 %v633, %v632
        %v730 = vpack.c.b16 %v635, %v634
        %v731 = vpack.c.b16 %v637, %v636
        %v732 = vpack.c.b16 %v639, %v638
        %v733 = vpack.c.b16 %v641, %v640
        %v734 = vpack.c.b16 %v643, %v642
        %v735 = vpack.c.b16 %v645, %v644
        %v736 = vpack.c.b16 %v647, %v646
        %v737 = vpack.c.b16 %v649, %v648
        %v738 = vpack.c.b16 %v651, %v650
        %v739 = vpack.c.b16 %v653, %v652
        %v740 = vpack.c.b16 %v655, %v654
        %v741 = vpack.c.b16 %v657, %v656
        %v742 = vpack.c.b16 %v659, %v658
        %v743 = vpack.c.b16 %v661, %v660
        %v744 = vpack.c.b16 %v663, %v662
        %v745 = vpack.c.b16 %v665, %v664
        %v746 = vpack.c.b16 %v667, %v666
        %v747 = vpack.c.b16 %v669, %v668
        %v748 = vpack.c.b16 %v671, %v670
        %v749 = vpack.c.b16 %v673, %v672
        %v750 = vpack.c.b16 %v675, %v674
        %v751 = vpack.c.b16 %v677, %v676
        %v752 = vpack.c.b16 %v679, %v678
        %v753 = vpack.c.b16 %v681, %v680
        %v754 = vpack.c.b16 %v683, %v682
        %v755 = vpack.c.b16 %v685, %v684
        %v756 = vpack.c.b16 %v687, %v686
        %v757 = vpack.c.b16 %v689, %v688
        %v758 = vpack.c.b16 %v691, %v690
        %v759 = vpack.c.b16 %v693, %v692
        %v760 = vpack.c.b16 %v695, %v694
        %v761 = vpack.c.b16 %v697, %v696
        %826 = vmatpush.bf16.msra.mxu0 %v705
        %827 = vmatpush.bf16.msra.mxu0 %v704
        %828 = vmatpush.bf16.msra.mxu0 %v703
        %829 = vmatpush.bf16.msra.mxu0 %v702
        %830 = vmatpush.bf16.msra.mxu0 %v701
        %831 = vmatpush.bf16.msra.mxu0 %v700
        %832 = vmatpush.bf16.msra.mxu0 %v699
        %833 = vmatpush.bf16.msra.mxu0 %v698
        %834 = vmatmul.bf16.gmra.mxu0 %v426
        %v835 = vpop.f32.mrf.mxu0
        %v836 = vadd.f32 0.0, %v835
        %v837 = vpop.f32.mrf.mxu0
        %v838 = vadd.f32 0.0, %v837
        %839 = vdwg.mxu0
        %840 = vmatpush.bf16.msra.mxu0 %v713
        %841 = vmatpush.bf16.msra.mxu0 %v712
        %842 = vmatpush.bf16.msra.mxu0 %v711
        %843 = vmatpush.bf16.msra.mxu0 %v710
        %844 = vmatpush.bf16.msra.mxu0 %v709
        %845 = vmatpush.bf16.msra.mxu0 %v708
        %846 = vmatpush.bf16.msra.mxu0 %v707
        %847 = vmatpush.bf16.msra.mxu0 %v706
        %848 = vmatmul.bf16.gmra.mxu0 %v427
        %v849 = vpop.f32.mrf.mxu0
        %v850 = vadd.f32 %v836, %v849
        %v851 = vpop.f32.mrf.mxu0
        %v852 = vadd.f32 %v838, %v851
        %853 = vdwg.mxu0
        %854 = vmatpush.bf16.msra.mxu0 %v721
        %855 = vmatpush.bf16.msra.mxu0 %v720
        %856 = vmatpush.bf16.msra.mxu0 %v719
        %857 = vmatpush.bf16.msra.mxu0 %v718
        %858 = vmatpush.bf16.msra.mxu0 %v717
        %859 = vmatpush.bf16.msra.mxu0 %v716
        %860 = vmatpush.bf16.msra.mxu0 %v715
        %861 = vmatpush.bf16.msra.mxu0 %v714
        %862 = vmatmul.bf16.gmra.mxu0 %v428
        %v863 = vpop.f32.mrf.mxu0
        %v864 = vadd.f32 %v850, %v863
        %v865 = vpop.f32.mrf.mxu0
        %v866 = vadd.f32 %v852, %v865
        %867 = vdwg.mxu0
        %868 = vmatpush.bf16.msra.mxu0 %v729
        %869 = vmatpush.bf16.msra.mxu0 %v728
        %870 = vmatpush.bf16.msra.mxu0 %v727
        %871 = vmatpush.bf16.msra.mxu0 %v726
        %872 = vmatpush.bf16.msra.mxu0 %v725
        %873 = vmatpush.bf16.msra.mxu0 %v724
        %874 = vmatpush.bf16.msra.mxu0 %v723
        %875 = vmatpush.bf16.msra.mxu0 %v722
        %876 = vmatmul.bf16.gmra.mxu0 %v429
        %v877 = vpop.f32.mrf.mxu0
        %v878 = vadd.f32 %v864, %v877
        %v879 = vpop.f32.mrf.mxu0
        %v880 = vadd.f32 %v866, %v879
        %881 = vdwg.mxu0
        %882 = vmatpush.bf16.msra.mxu0 %v737
        %883 = vmatpush.bf16.msra.mxu0 %v736
        %884 = vmatpush.bf16.msra.mxu0 %v735
        %885 = vmatpush.bf16.msra.mxu0 %v734
        %886 = vmatpush.bf16.msra.mxu0 %v733
        %887 = vmatpush.bf16.msra.mxu0 %v732
        %888 = vmatpush.bf16.msra.mxu0 %v731
        %889 = vmatpush.bf16.msra.mxu0 %v730
        %890 = vmatmul.bf16.gmra.mxu0 %v430
        %v891 = vpop.f32.mrf.mxu0
        %v892 = vadd.f32 %v878, %v891
        %v893 = vpop.f32.mrf.mxu0
        %v894 = vadd.f32 %v880, %v893
        %895 = vdwg.mxu0
        %896 = vmatpush.bf16.msra.mxu0 %v745
        %897 = vmatpush.bf16.msra.mxu0 %v744
        %898 = vmatpush.bf16.msra.mxu0 %v743
        %899 = vmatpush.bf16.msra.mxu0 %v742
        %900 = vmatpush.bf16.msra.mxu0 %v741
        %901 = vmatpush.bf16.msra.mxu0 %v740
        %902 = vmatpush.bf16.msra.mxu0 %v739
        %903 = vmatpush.bf16.msra.mxu0 %v738
        %904 = vmatmul.bf16.gmra.mxu0 %v431
        %v905 = vpop.f32.mrf.mxu0
        %v906 = vadd.f32 %v892, %v905
        %v907 = vpop.f32.mrf.mxu0
        %v908 = vadd.f32 %v894, %v907
        %909 = vdwg.mxu0
        %910 = vmatpush.bf16.msra.mxu0 %v753
        %911 = vmatpush.bf16.msra.mxu0 %v752
        %912 = vmatpush.bf16.msra.mxu0 %v751
        %913 = vmatpush.bf16.msra.mxu0 %v750
        %914 = vmatpush.bf16.msra.mxu0 %v749
        %915 = vmatpush.bf16.msra.mxu0 %v748
        %916 = vmatpush.bf16.msra.mxu0 %v747
        %917 = vmatpush.bf16.msra.mxu0 %v746
        %918 = vmatmul.bf16.gmra.mxu0 %v432
        %v919 = vpop.f32.mrf.mxu0
        %v920 = vadd.f32 %v906, %v919
        %v921 = vpop.f32.mrf.mxu0
        %v922 = vadd.f32 %v908, %v921
        %923 = vdwg.mxu0
        %924 = vmatpush.bf16.msra.mxu0 %v761
        %925 = vmatpush.bf16.msra.mxu0 %v760
        %926 = vmatpush.bf16.msra.mxu0 %v759
        %927 = vmatpush.bf16.msra.mxu0 %v758
        %928 = vmatpush.bf16.msra.mxu0 %v757
        %929 = vmatpush.bf16.msra.mxu0 %v756
        %930 = vmatpush.bf16.msra.mxu0 %v755
        %931 = vmatpush.bf16.msra.mxu0 %v754
        %932 = vmatmul.bf16.gmra.mxu0 %v433
        %v933 = vpop.f32.mrf.mxu0
        %v934 = vadd.f32 %v920, %v933
        %v935 = vpop.f32.mrf.mxu0
        %v936 = vadd.f32 %v922, %v935
        %937 = vdwg.mxu0
        %s938 = scalar_lea.vmem %s223, 64 [#allocation4]
        %v939 = vld [vmem:[%s938] sm:$0xff]
        %v940 = vld [vmem:[%s938 + $0x8] sm:$0xff]
        %v941 = vld [vmem:[%s938 + $0x10] sm:$0xff]
        %v942 = vld [vmem:[%s938 + $0x18] sm:$0xff]
        %v943 = vld [vmem:[%s938 + $0x20] sm:$0xff]
        %v944 = vld [vmem:[%s938 + $0x28] sm:$0xff]
        %v945 = vld [vmem:[%s938 + $0x30] sm:$0xff]
        %v946 = vld [vmem:[%s938 + $0x38] sm:$0xff]
        %v955 = vunpack.c.l.b16 %v939
        %v956 = vunpack.c.h.b16 %v939
        %v957 = vunpack.c.l.b16 %v940
        %v958 = vunpack.c.h.b16 %v940
        %v959 = vunpack.c.l.b16 %v941
        %v960 = vunpack.c.h.b16 %v941
        %v961 = vunpack.c.l.b16 %v942
        %v962 = vunpack.c.h.b16 %v942
        %v963 = vunpack.c.l.b16 %v943
        %v964 = vunpack.c.h.b16 %v943
        %v965 = vunpack.c.l.b16 %v944
        %v966 = vunpack.c.h.b16 %v944
        %v967 = vunpack.c.l.b16 %v945
        %v968 = vunpack.c.h.b16 %v945
        %v969 = vunpack.c.l.b16 %v946
        %v970 = vunpack.c.h.b16 %v946
        %v971 = vpack.c.b16 %v963, %v955
        %v972 = vpack.c.b16 %v964, %v956
        %v973 = vpack.c.b16 %v965, %v957
        %v974 = vpack.c.b16 %v966, %v958
        %v975 = vpack.c.b16 %v967, %v959
        %v976 = vpack.c.b16 %v968, %v960
        %v977 = vpack.c.b16 %v969, %v961
        %v978 = vpack.c.b16 %v970, %v962
        %987 = vmatpush.bf16.msra.mxu0 %v705
        %988 = vmatpush.bf16.msra.mxu0 %v704
        %989 = vmatpush.bf16.msra.mxu0 %v703
        %990 = vmatpush.bf16.msra.mxu0 %v702
        %991 = vmatpush.bf16.msra.mxu0 %v701
        %992 = vmatpush.bf16.msra.mxu0 %v700
        %993 = vmatpush.bf16.msra.mxu0 %v699
        %994 = vmatpush.bf16.msra.mxu0 %v698
        %995 = vmatmul.bf16.gmra.mxu0 %v971
        %v996 = vpop.f32.mrf.mxu0
        %v997 = vadd.f32 0.0, %v996
        %v998 = vpop.f32.mrf.mxu0
        %v999 = vadd.f32 0.0, %v998
        %1000 = vdwg.mxu0
        %1001 = vmatpush.bf16.msra.mxu0 %v713
        %1002 = vmatpush.bf16.msra.mxu0 %v712
        %1003 = vmatpush.bf16.msra.mxu0 %v711
        %1004 = vmatpush.bf16.msra.mxu0 %v710
        %1005 = vmatpush.bf16.msra.mxu0 %v709
        %1006 = vmatpush.bf16.msra.mxu0 %v708
        %1007 = vmatpush.bf16.msra.mxu0 %v707
        %1008 = vmatpush.bf16.msra.mxu0 %v706
        %1009 = vmatmul.bf16.gmra.mxu0 %v972
        %v1010 = vpop.f32.mrf.mxu0
        %v1011 = vadd.f32 %v997, %v1010
        %v1012 = vpop.f32.mrf.mxu0
        %v1013 = vadd.f32 %v999, %v1012
        %1014 = vdwg.mxu0
        %1015 = vmatpush.bf16.msra.mxu0 %v721
        %1016 = vmatpush.bf16.msra.mxu0 %v720
        %1017 = vmatpush.bf16.msra.mxu0 %v719
        %1018 = vmatpush.bf16.msra.mxu0 %v718
        %1019 = vmatpush.bf16.msra.mxu0 %v717
        %1020 = vmatpush.bf16.msra.mxu0 %v716
        %1021 = vmatpush.bf16.msra.mxu0 %v715
        %1022 = vmatpush.bf16.msra.mxu0 %v714
        %1023 = vmatmul.bf16.gmra.mxu0 %v973
        %v1024 = vpop.f32.mrf.mxu0
        %v1025 = vadd.f32 %v1011, %v1024
        %v1026 = vpop.f32.mrf.mxu0
        %v1027 = vadd.f32 %v1013, %v1026
        %1028 = vdwg.mxu0
        %1029 = vmatpush.bf16.msra.mxu0 %v729
        %1030 = vmatpush.bf16.msra.mxu0 %v728
        %1031 = vmatpush.bf16.msra.mxu0 %v727
        %1032 = vmatpush.bf16.msra.mxu0 %v726
        %1033 = vmatpush.bf16.msra.mxu0 %v725
        %1034 = vmatpush.bf16.msra.mxu0 %v724
        %1035 = vmatpush.bf16.msra.mxu0 %v723
        %1036 = vmatpush.bf16.msra.mxu0 %v722
        %1037 = vmatmul.bf16.gmra.mxu0 %v974
        %v1038 = vpop.f32.mrf.mxu0
        %v1039 = vadd.f32 %v1025, %v1038
        %v1040 = vpop.f32.mrf.mxu0
        %v1041 = vadd.f32 %v1027, %v1040
        %1042 = vdwg.mxu0
        %1043 = vmatpush.bf16.msra.mxu0 %v737
        %1044 = vmatpush.bf16.msra.mxu0 %v736
        %1045 = vmatpush.bf16.msra.mxu0 %v735
        %1046 = vmatpush.bf16.msra.mxu0 %v734
        %1047 = vmatpush.bf16.msra.mxu0 %v733
        %1048 = vmatpush.bf16.msra.mxu0 %v732
        %1049 = vmatpush.bf16.msra.mxu0 %v731
        %1050 = vmatpush.bf16.msra.mxu0 %v730
        %1051 = vmatmul.bf16.gmra.mxu0 %v975
        %v1052 = vpop.f32.mrf.mxu0
        %v1053 = vadd.f32 %v1039, %v1052
        %v1054 = vpop.f32.mrf.mxu0
        %v1055 = vadd.f32 %v1041, %v1054
        %1056 = vdwg.mxu0
        %1057 = vmatpush.bf16.msra.mxu0 %v745
        %1058 = vmatpush.bf16.msra.mxu0 %v744
        %1059 = vmatpush.bf16.msra.mxu0 %v743
        %1060 = vmatpush.bf16.msra.mxu0 %v742
        %1061 = vmatpush.bf16.msra.mxu0 %v741
        %1062 = vmatpush.bf16.msra.mxu0 %v740
        %1063 = vmatpush.bf16.msra.mxu0 %v739
        %1064 = vmatpush.bf16.msra.mxu0 %v738
        %1065 = vmatmul.bf16.gmra.mxu0 %v976
        %v1066 = vpop.f32.mrf.mxu0
        %v1067 = vadd.f32 %v1053, %v1066
        %v1068 = vpop.f32.mrf.mxu0
        %v1069 = vadd.f32 %v1055, %v1068
        %1070 = vdwg.mxu0
        %1071 = vmatpush.bf16.msra.mxu0 %v753
        %1072 = vmatpush.bf16.msra.mxu0 %v752
        %1073 = vmatpush.bf16.msra.mxu0 %v751
        %1074 = vmatpush.bf16.msra.mxu0 %v750
        %1075 = vmatpush.bf16.msra.mxu0 %v749
        %1076 = vmatpush.bf16.msra.mxu0 %v748
        %1077 = vmatpush.bf16.msra.mxu0 %v747
        %1078 = vmatpush.bf16.msra.mxu0 %v746
        %1079 = vmatmul.bf16.gmra.mxu0 %v977
        %v1080 = vpop.f32.mrf.mxu0
        %v1081 = vadd.f32 %v1067, %v1080
        %v1082 = vpop.f32.mrf.mxu0
        %v1083 = vadd.f32 %v1069, %v1082
        %1084 = vdwg.mxu0
        %1085 = vmatpush.bf16.msra.mxu0 %v761
        %1086 = vmatpush.bf16.msra.mxu0 %v760
        %1087 = vmatpush.bf16.msra.mxu0 %v759
        %1088 = vmatpush.bf16.msra.mxu0 %v758
        %1089 = vmatpush.bf16.msra.mxu0 %v757
        %1090 = vmatpush.bf16.msra.mxu0 %v756
        %1091 = vmatpush.bf16.msra.mxu0 %v755
        %1092 = vmatpush.bf16.msra.mxu0 %v754
        %1093 = vmatmul.bf16.gmra.mxu0 %v978
        %v1094 = vpop.f32.mrf.mxu0
        %v1095 = vadd.f32 %v1081, %v1094
        %v1096 = vpop.f32.mrf.mxu0
        %v1097 = vadd.f32 %v1083, %v1096
        %1098 = vdwg.mxu0
        %s1099 = scalar_lea.vmem %s223, 128 [#allocation4]
        %v1100 = vld [vmem:[%s1099] sm:$0xff]
        %v1101 = vld [vmem:[%s1099 + $0x8] sm:$0xff]
        %v1102 = vld [vmem:[%s1099 + $0x10] sm:$0xff]
        %v1103 = vld [vmem:[%s1099 + $0x18] sm:$0xff]
        %v1104 = vld [vmem:[%s1099 + $0x20] sm:$0xff]
        %v1105 = vld [vmem:[%s1099 + $0x28] sm:$0xff]
        %v1106 = vld [vmem:[%s1099 + $0x30] sm:$0xff]
        %v1107 = vld [vmem:[%s1099 + $0x38] sm:$0xff]
        %v1116 = vunpack.c.l.b16 %v1100
        %v1117 = vunpack.c.h.b16 %v1100
        %v1118 = vunpack.c.l.b16 %v1101
        %v1119 = vunpack.c.h.b16 %v1101
        %v1120 = vunpack.c.l.b16 %v1102
        %v1121 = vunpack.c.h.b16 %v1102
        %v1122 = vunpack.c.l.b16 %v1103
        %v1123 = vunpack.c.h.b16 %v1103
        %v1124 = vunpack.c.l.b16 %v1104
        %v1125 = vunpack.c.h.b16 %v1104
        %v1126 = vunpack.c.l.b16 %v1105
        %v1127 = vunpack.c.h.b16 %v1105
        %v1128 = vunpack.c.l.b16 %v1106
        %v1129 = vunpack.c.h.b16 %v1106
        %v1130 = vunpack.c.l.b16 %v1107
        %v1131 = vunpack.c.h.b16 %v1107
        %v1132 = vpack.c.b16 %v1124, %v1116
        %v1133 = vpack.c.b16 %v1125, %v1117
        %v1134 = vpack.c.b16 %v1126, %v1118
        %v1135 = vpack.c.b16 %v1127, %v1119
        %v1136 = vpack.c.b16 %v1128, %v1120
        %v1137 = vpack.c.b16 %v1129, %v1121
        %v1138 = vpack.c.b16 %v1130, %v1122
        %v1139 = vpack.c.b16 %v1131, %v1123
        %1148 = vmatpush.bf16.msra.mxu0 %v705
        %1149 = vmatpush.bf16.msra.mxu0 %v704
        %1150 = vmatpush.bf16.msra.mxu0 %v703
        %1151 = vmatpush.bf16.msra.mxu0 %v702
        %1152 = vmatpush.bf16.msra.mxu0 %v701
        %1153 = vmatpush.bf16.msra.mxu0 %v700
        %1154 = vmatpush.bf16.msra.mxu0 %v699
        %1155 = vmatpush.bf16.msra.mxu0 %v698
        %1156 = vmatmul.bf16.gmra.mxu0 %v1132
        %v1157 = vpop.f32.mrf.mxu0
        %v1158 = vadd.f32 0.0, %v1157
        %v1159 = vpop.f32.mrf.mxu0
        %v1160 = vadd.f32 0.0, %v1159
        %1161 = vdwg.mxu0
        %1162 = vmatpush.bf16.msra.mxu0 %v713
        %1163 = vmatpush.bf16.msra.mxu0 %v712
        %1164 = vmatpush.bf16.msra.mxu0 %v711
        %1165 = vmatpush.bf16.msra.mxu0 %v710
        %1166 = vmatpush.bf16.msra.mxu0 %v709
        %1167 = vmatpush.bf16.msra.mxu0 %v708
        %1168 = vmatpush.bf16.msra.mxu0 %v707
        %1169 = vmatpush.bf16.msra.mxu0 %v706
        %1170 = vmatmul.bf16.gmra.mxu0 %v1133
        %v1171 = vpop.f32.mrf.mxu0
        %v1172 = vadd.f32 %v1158, %v1171
        %v1173 = vpop.f32.mrf.mxu0
        %v1174 = vadd.f32 %v1160, %v1173
        %1175 = vdwg.mxu0
        %1176 = vmatpush.bf16.msra.mxu0 %v721
        %1177 = vmatpush.bf16.msra.mxu0 %v720
        %1178 = vmatpush.bf16.msra.mxu0 %v719
        %1179 = vmatpush.bf16.msra.mxu0 %v718
        %1180 = vmatpush.bf16.msra.mxu0 %v717
        %1181 = vmatpush.bf16.msra.mxu0 %v716
        %1182 = vmatpush.bf16.msra.mxu0 %v715
        %1183 = vmatpush.bf16.msra.mxu0 %v714
        %1184 = vmatmul.bf16.gmra.mxu0 %v1134
        %v1185 = vpop.f32.mrf.mxu0
        %v1186 = vadd.f32 %v1172, %v1185
        %v1187 = vpop.f32.mrf.mxu0
        %v1188 = vadd.f32 %v1174, %v1187
        %1189 = vdwg.mxu0
        %1190 = vmatpush.bf16.msra.mxu0 %v729
        %1191 = vmatpush.bf16.msra.mxu0 %v728
        %1192 = vmatpush.bf16.msra.mxu0 %v727
        %1193 = vmatpush.bf16.msra.mxu0 %v726
        %1194 = vmatpush.bf16.msra.mxu0 %v725
        %1195 = vmatpush.bf16.msra.mxu0 %v724
        %1196 = vmatpush.bf16.msra.mxu0 %v723
        %1197 = vmatpush.bf16.msra.mxu0 %v722
        %1198 = vmatmul.bf16.gmra.mxu0 %v1135
        %v1199 = vpop.f32.mrf.mxu0
        %v1200 = vadd.f32 %v1186, %v1199
        %v1201 = vpop.f32.mrf.mxu0
        %v1202 = vadd.f32 %v1188, %v1201
        %1203 = vdwg.mxu0
        %1204 = vmatpush.bf16.msra.mxu0 %v737
        %1205 = vmatpush.bf16.msra.mxu0 %v736
        %1206 = vmatpush.bf16.msra.mxu0 %v735
        %1207 = vmatpush.bf16.msra.mxu0 %v734
        %1208 = vmatpush.bf16.msra.mxu0 %v733
        %1209 = vmatpush.bf16.msra.mxu0 %v732
        %1210 = vmatpush.bf16.msra.mxu0 %v731
        %1211 = vmatpush.bf16.msra.mxu0 %v730
        %1212 = vmatmul.bf16.gmra.mxu0 %v1136
        %v1213 = vpop.f32.mrf.mxu0
        %v1214 = vadd.f32 %v1200, %v1213
        %v1215 = vpop.f32.mrf.mxu0
        %v1216 = vadd.f32 %v1202, %v1215
        %1217 = vdwg.mxu0
        %1218 = vmatpush.bf16.msra.mxu0 %v745
        %1219 = vmatpush.bf16.msra.mxu0 %v744
        %1220 = vmatpush.bf16.msra.mxu0 %v743
        %1221 = vmatpush.bf16.msra.mxu0 %v742
        %1222 = vmatpush.bf16.msra.mxu0 %v741
        %1223 = vmatpush.bf16.msra.mxu0 %v740
        %1224 = vmatpush.bf16.msra.mxu0 %v739
        %1225 = vmatpush.bf16.msra.mxu0 %v738
        %1226 = vmatmul.bf16.gmra.mxu0 %v1137
        %v1227 = vpop.f32.mrf.mxu0
        %v1228 = vadd.f32 %v1214, %v1227
        %v1229 = vpop.f32.mrf.mxu0
        %v1230 = vadd.f32 %v1216, %v1229
        %1231 = vdwg.mxu0
        %1232 = vmatpush.bf16.msra.mxu0 %v753
        %1233 = vmatpush.bf16.msra.mxu0 %v752
        %1234 = vmatpush.bf16.msra.mxu0 %v751
        %1235 = vmatpush.bf16.msra.mxu0 %v750
        %1236 = vmatpush.bf16.msra.mxu0 %v749
        %1237 = vmatpush.bf16.msra.mxu0 %v748
        %1238 = vmatpush.bf16.msra.mxu0 %v747
        %1239 = vmatpush.bf16.msra.mxu0 %v746
        %1240 = vmatmul.bf16.gmra.mxu0 %v1138
        %v1241 = vpop.f32.mrf.mxu0
        %v1242 = vadd.f32 %v1228, %v1241
        %v1243 = vpop.f32.mrf.mxu0
        %v1244 = vadd.f32 %v1230, %v1243
        %1245 = vdwg.mxu0
        %1246 = vmatpush.bf16.msra.mxu0 %v761
        %1247 = vmatpush.bf16.msra.mxu0 %v760
        %1248 = vmatpush.bf16.msra.mxu0 %v759
        %1249 = vmatpush.bf16.msra.mxu0 %v758
        %1250 = vmatpush.bf16.msra.mxu0 %v757
        %1251 = vmatpush.bf16.msra.mxu0 %v756
        %1252 = vmatpush.bf16.msra.mxu0 %v755
        %1253 = vmatpush.bf16.msra.mxu0 %v754
        %1254 = vmatmul.bf16.gmra.mxu0 %v1139
        %v1255 = vpop.f32.mrf.mxu0
        %v1256 = vadd.f32 %v1242, %v1255
        %v1257 = vpop.f32.mrf.mxu0
        %v1258 = vadd.f32 %v1244, %v1257
        %1259 = vdwg.mxu0
        %v1260 = vstv %s263
        %v1261 = vmul.f32 %v1260, %v934
        %v1262 = vmul.f32 %v1260, %v936
        %v1263 = vstv %s264
        %v1264 = vmul.f32 %v1263, %v1095
        %v1265 = vmul.f32 %v1263, %v1097
        %v1266 = vadd.f32 %v1261, %v1264
        %v1267 = vadd.f32 %v1262, %v1265
        %v1268 = vstv %s265
        %v1269 = vmul.f32 %v1268, %v1256
        %v1270 = vmul.f32 %v1268, %v1258
        %v1271 = vadd.f32 %v1266, %v1269
        %v1272 = vadd.f32 %v1267, %v1270
        %v1273 = vld [vmem:[%s3] sm:$0x1]
        %v1275 = vperm.slane %v1273, 0
        %v1277 = vadd.f32 %v1271, %v1275
        %v1278 = vadd.f32 %v1272, %v1275
        %v1279 = vmax.f32 %v1277, 0.0
        %v1280 = vmax.f32 %v1278, 0.0
        %v1281 = vpack.c.bf16 %v1279, %v1279
        %v1282 = vpack.c.bf16 %v1280, %v1280
        %1283 = vst [vmem:[%s251] sm:$0xf] %v1281
        %1284 = vst [vmem:[%s251 + $0x4] sm:$0xf] %v1282
        %s1285 = sand.u32 %s106, 1
        %s1286 = scalar_lea.sflag [#allocation6], %s1285
        %s1287 = sand.u32 %s106, 1
        %s1288 = smul.addr %s1287, 8
        %s1289 = scalar_lea.vmem [#allocation9], %s1288
        // Predicated region
        $region41: #{elmo_head.1} parent=31 // pred_check
          %p1290 = pneg %p116
        $region42: #{elmo_head.1} parent=31 // pred_check_branch
          %1292 = sbr.rel (%p1290) target = $region44
        $region43: #{elmo_head.1} parent=31 // pred_region
          %s1293 = smul.u32 2, %s30
          %s1294 = ssub.s32 3, %s1293
          %p1295 = scmp.lt.s32.totalorder %s1294, 2
          %s1296 = scalar_select %p1295, %s1294, 2
          %s1297 = smul.u32 4, %s1296
          %s1298 = ssub.s32 8, %s1297
          %s1299 = sshll.u32 %s1298, 4
          %1300 = vsyncadd %s1286, %s1299
          %p1301 = scmp.ne.s32.totalorder 0, %s1297
          %s1302 = smul.addr %s1293, 4
          %s1303 = scalar_lea.hbm %s4, %s1302
          %s1304 = smul.u32 4, %s1296
          %s1305 = sshll.u32 %s1289, 4
          %s1306 = int_to_ptr.vmem [resolvable:$true] %s1305
          %s1307 = sshll.u32 %s1303, 4
          %s1308 = int_to_ptr.hbm [resolvable:$true] %s1307
          %s1309 = sshll.u32 %s1304, 4
          %1313 = dma.vmem_to_hbm [thread:$0]  (%p1301), %s1306, %s1309, %s1308, %s1286, 64, 64, 4
        $region44: #{elmo_head.1} parent=31 // pred_fallthru
          _
      $region32: #{elmo_head.1} parent=5 // pred_fallthru
        _
      %p1314 = scmp.le.s32.totalorder 2, %s25
      // Predicated region
      $region45: #{elmo_head.1} parent=5 // pred_check
        %p1315 = pneg %p1314
      $region46: #{elmo_head.1} parent=5 // pred_check_branch
        %1317 = sbr.rel (%p1315) target = $region48
      $region47: #{elmo_head.1} parent=5 // pred_region
        %s1318 = ssub.s32 %s25, 2
        // Predicated region
        $region49: #{elmo_head.1} parent=47 // pred_check
          %p1319 = pneg %p122
        $region50: #{elmo_head.1} parent=47 // pred_check_branch
          %1321 = sbr.rel (%p1319) target = $region52
        $region51: #{elmo_head.1} parent=47 // pred_region
          %s1322 = sand.u32 %s107, 1
          %s1323 = scalar_lea.sflag [#allocation6], %s1322
          %s1324 = sand.u32 %s107, 1
          %s1325 = smul.addr %s1324, 8
          %s1326 = scalar_lea.vmem [#allocation9], %s1325
          %1328 = dma.done %s1323, 128
        $region52: #{elmo_head.1} parent=47 // pred_fallthru
          _
      $region48: #{elmo_head.1} parent=5 // pred_fallthru
        _
    $region6: #{elmo_head.1} parent=1 // loop_footer
      %s29 = sadd.s32 1, %s25
    $region7: #{elmo_head.1} parent=1 // loop_footer_branch
      %24 = sbr.rel target = $region3
    $region8: #{elmo_head.1} parent=1 // loop_exit
      _
    %1329 = vsyncpa [#allocation5], 1
    %s1330 = scalar_lea.sflag [#allocation5], 1
    %1331 = vsyncpa %s1330, 1
    %1332 = vsyncpa [#allocation8], 1
    %1333 = vsyncpa [#allocation6], 1
    %s1334 = scalar_lea.sflag [#allocation6], 1
    %1335 = vsyncpa %s1334, 1

</llo_original>
